<compile_context>
chip_gen: v7x
topology: tpu7x:2x2x1
jax: 0.10.0
libtpu: 0.0.40
codegen_flags: <defaults>
</compile_context>

<pallas_src>
import math

import jax
import jax.numpy as jnp
from jax import lax
from jax.experimental import pallas as pl
from jax.experimental.pallas import tpu as pltpu

BN_EPS = 1e-5


def _round_up(a, b):
    return ((a + b - 1) // b) * b


def _vmem_capacity_bytes():
    try:
        return int(pltpu.get_tpu_info().vmem_capacity_bytes)
    except Exception:
        return 64 * 1024 * 1024          # v7x floor -> safe on every generation


def _stats_kernel(x_ref, o_ref):
    # x_ref: (RT, S) f32 -- RT (n, c)-rows of the ORIGINAL NCHW tensor.
    # o_ref: (RT, 2) f32 -- per-row [sum, centered sum-of-squares (M2)].
    x = x_ref[...]
    s = jnp.sum(x, axis=1, keepdims=True)                  # (RT, 1)
    mu = s * (1.0 / x.shape[1])                            # per-row mean
    d = x - mu
    m2 = jnp.sum(d * d, axis=1, keepdims=True)             # (RT, 1)
    o_ref[...] = jnp.concatenate([s, m2], axis=1)


def _main_kernel(x_ref, scale_ref, shift_ref, w_ref, o_ref):
    # x_ref:     (2*TR, Wh, 2C) f32 -- 2*TR consecutive NHWC image rows; the
    #            W-pair is already folded into the channel/lane axis.
    # scale_ref: (1, 1, 2C) f32 folded BN scale (duplicated per W-pixel).
    # shift_ref: (1, 1, 2C) f32 folded BN shift.
    # w_ref:     (2C, CoutP) bf16 stacked 1x1-conv weight (1/4 pool folded in).
    # o_ref:     (TR*Wh, CoutP) f32 pooled + projected output rows.
    x = x_ref[...]
    z = jnp.maximum(x * scale_ref[...] + shift_ref[...], 0.0)   # BN+ReLU, f32 VPU
    m2, wh, c2 = z.shape
    tr = m2 // 2
    z4 = z.reshape(tr, 2, wh, c2)
    zh = z4[:, 0] + z4[:, 1]                                    # H-pair sum (VPU add)
    lhs = zh.reshape(tr * wh, c2).astype(jnp.bfloat16)
    # The MXU performs the W-pair pool sum + channel contraction in one matmul.
    o_ref[...] = jnp.dot(lhs, w_ref[...], preferred_element_type=jnp.float32)


def transition_layer(x_nchw, gamma, beta, conv_w):
    """x_nchw: (N, Cin, H, W); conv_w: (Cout, Cin, 1, 1). Training-mode BN."""
    N, C, H, W = x_nchw.shape
    Cout = conv_w.shape[0]
    assert H % 2 == 0 and W % 2 == 0, "AvgPool2d(2) needs even H, W"
    Hh, Wh = H // 2, W // 2
    S = H * W
    NC = N * C
    R = N * Hh                             # pooled output rows in the main grid

    # ---- VMEM budgeting (generation aware: 64 MiB v7x, 128 MiB v5e/v6e) ----
    vmem_cap = _vmem_capacity_bytes()
    vmem_limit = min(vmem_cap * 3 // 4, 96 * 1024 * 1024)
    tile_budget = int(vmem_limit * 0.8)    # ~20% headroom for compiler scratch

    x32 = x_nchw.astype(jnp.float32)

    # ---------- Pass 1: per-(n,c) row sum & centered M2, reads NCHW directly ----------
    x_rows_nc = x32.reshape(NC, S)         # free view of the original layout
    per_row = 2 * S * 4 + 16               # double-buffered input + tiny output
    rt_max = max(8, (tile_budget // per_row) // 8 * 8)
    if NC < 8:
        rt = NC                            # block == full dim (allowed)
    else:
        rt = min(rt_max, _round_up(NC, 8))
        nt = pl.cdiv(NC, rt)
        if nt == 1 and NC >= 16:
            rt = _round_up(pl.cdiv(NC, 2), 8)            # keep both v7x TCs busy
        elif nt > 1 and nt % 2 == 1:
            rt = max(8, _round_up(pl.cdiv(NC, nt + 1), 8))
    nt = pl.cdiv(NC, rt)

    stats = pl.pallas_call(
        _stats_kernel,
        grid=(nt,),
        in_specs=[pl.BlockSpec((rt, S), lambda i: (i, 0))],
        out_specs=pl.BlockSpec((rt, 2), lambda i: (i, 0)),
        out_shape=jax.ShapeDtypeStruct((NC, 2), jnp.float32),
        compiler_params=pltpu.CompilerParams(
            dimension_semantics=("parallel",),
            vmem_limit_bytes=vmem_limit),
    )(x_rows_nc)

    # Chan combine of the per-(n,c) partials -> per-channel mean / biased var.
    sums = stats[:, 0].reshape(N, C)
    m2s = stats[:, 1].reshape(N, C)
    mean_nc = sums / S
    M = N * S
    mean = jnp.sum(sums, axis=0) / M                               # (C,)
    var = (jnp.sum(m2s, axis=0)
           + S * jnp.sum((mean_nc - mean[None, :]) ** 2, axis=0)) / M
    var = jnp.maximum(var, 0.0)                                    # biased (training mode)
    inv_std = lax.rsqrt(var + BN_EPS)
    g32 = gamma.astype(jnp.float32)
    scale_c = g32 * inv_std
    shift_c = beta.astype(jnp.float32) - mean * scale_c
    # The (..., Wh, 2C) view is laid out as [left-pixel C | right-pixel C].
    scale2 = jnp.tile(scale_c, 2).reshape(1, 1, 2 * C)
    shift2 = jnp.tile(shift_c, 2).reshape(1, 1, 2 * C)

    # Conv weight: (Cout, Cin) -> (2*Cin, CoutP); 1/4 pool factor folded in,
    # Cout padded to a lane-dense multiple of 128, rows stacked so the MXU also
    # performs the horizontal pool sum.
    CoutP = _round_up(Cout, 128)
    w_ct = jnp.transpose(conv_w.reshape(Cout, C).astype(jnp.float32)) * 0.25
    w_ct = jnp.pad(w_ct, ((0, 0), (0, CoutP - Cout)))
    w2 = jnp.concatenate([w_ct, w_ct], axis=0).astype(jnp.bfloat16)   # (2C, CoutP)

    # ---------- Pass 2: BN + ReLU + 2x2 avg-pool + 1x1 conv (tiled, parallel) ----------
    # Single layout change: NCHW -> NHWC; everything else is a free reshape.
    x_nhwc = jnp.transpose(x32, (0, 2, 3, 1))            # (N, H, W, C)
    x_rows = x_nhwc.reshape(N * H, Wh, 2 * C)            # W-pair folded into lanes

    need = 8 // math.gcd(Wh, 8)                          # makes TR*Wh a multiple of 8
    fixed = 2 * (w2.size * 2 + 2 * (2 * C) * 4 * 2)      # dbl-buffered weight + scale/shift
    per_out_row = 2 * (2 * Wh * 2 * C * 4) + 2 * (Wh * CoutP * 4)
    avail = max(tile_budget - fixed, per_out_row)
    tr_max = max(need, (avail // per_out_row) // need * need)
    tr = min(tr_max, _round_up(R, need))
    nm = pl.cdiv(R, tr)
    if nm == 1 and R > need:
        tr = max(need, _round_up(pl.cdiv(R, 2), need))   # split across the 2 v7x cores
    elif nm > 1 and nm % 2 == 1:
        tr = max(need, _round_up(pl.cdiv(R, nm + 1), need))
    nm = pl.cdiv(R, tr)

    out2d = pl.pallas_call(
        _main_kernel,
        grid=(nm,),
        in_specs=[
            pl.BlockSpec((2 * tr, Wh, 2 * C), lambda i: (i, 0, 0)),
            pl.BlockSpec((1, 1, 2 * C), lambda i: (0, 0, 0)),
            pl.BlockSpec((1, 1, 2 * C), lambda i: (0, 0, 0)),
            pl.BlockSpec((2 * C, CoutP), lambda i: (0, 0)),
        ],
        out_specs=pl.BlockSpec((tr * Wh, CoutP), lambda i: (i, 0)),
        out_shape=jax.ShapeDtypeStruct((R * Wh, CoutP), jnp.float32),
        compiler_params=pltpu.CompilerParams(
            dimension_semantics=("parallel",),
            vmem_limit_bytes=vmem_limit),
    )(x_rows, scale2, shift2, w2)

    # Strip channel padding, back to NCHW like PyTorch.
    return out2d[:, :Cout].reshape(N, Hh, Wh, Cout).transpose(0, 3, 1, 2)


def _reference(x_nchw, gamma, beta, conv_w):
    # Pure-JAX f32 reference matching PyTorch training-mode forward.
    mean = jnp.mean(x_nchw, axis=(0, 2, 3), keepdims=True)
    var = jnp.mean((x_nchw - mean) ** 2, axis=(0, 2, 3), keepdims=True)
    z = (x_nchw - mean) / jnp.sqrt(var + BN_EPS)
    z = z * gamma.reshape(1, -1, 1, 1) + beta.reshape(1, -1, 1, 1)
    z = jnp.maximum(z, 0.0)
    y = jnp.einsum('nchw,oc->nohw', z, conv_w.reshape(conv_w.shape[0], -1))
    N, Co, H, W = y.shape
    return y.reshape(N, Co, H // 2, 2, W // 2, 2).mean(axis=(3, 5))


if __name__ == "__main__":
    key = jax.random.PRNGKey(0)
    k1, k2, k3, k4 = jax.random.split(key, 4)

    N, Cin, Cout, H, W = 2, 4, 8, 16, 16
    x = jax.random.normal(k1, (N, Cin, H, W), dtype=jnp.float32)
    gamma = 1.0 + 0.1 * jax.random.normal(k2, (Cin,), dtype=jnp.float32)
    beta = 0.1 * jax.random.normal(k3, (Cin,), dtype=jnp.float32)
    conv_w = 0.2 * jax.random.normal(k4, (Cout, Cin, 1, 1), dtype=jnp.float32)

    out = jax.block_until_ready(jax.jit(transition_layer)(x, gamma, beta, conv_w))
    ref = _reference(x, gamma, beta, conv_w)

    assert out.shape == (N, Cout, H // 2, W // 2), out.shape
    max_err = float(jnp.max(jnp.abs(out - ref)))
    # bf16 MXU operands -> allow small rounding difference vs the f32 reference.
    assert jnp.allclose(out, ref, atol=2e-2, rtol=2e-2), f"mismatch vs reference (max abs err {max_err})"
    print("KERNEL_OK")
</pallas_src>

<mosaic_0001>
module attributes {stable_mosaic.version = 11 : i64} {
  func.func @_stats_kernel(%arg0: i32, %arg1: memref<8x256xf32, #tpu.memory_space<vmem>>, %arg2: memref<8x2xf32, #tpu.memory_space<vmem>>) attributes {dimension_semantics = [#tpu.dimension_semantics<parallel>], iteration_bounds = array<i64: 1>, scalar_prefetch = 0 : i64, scratch_operands = 0 : i64, tpu.core_type = #tpu.core_type<tc>, window_params = [{transform_indices = @transform_0, window_bounds = array<i64: 8, 256>}, {transform_indices = @transform_1, window_bounds = array<i64: 8, 2>}]} {
    %c0 = arith.constant 0 : index
    %c0_0 = arith.constant 0 : index
    %0 = vector.load %arg1[%c0, %c0_0] : memref<8x256xf32, #tpu.memory_space<vmem>>, vector<8x256xf32>
    %cst = arith.constant dense<0.000000e+00> : vector<8xf32>
    %1 = vector.multi_reduction <add>, %0, %cst [1] : vector<8x256xf32> to vector<8xf32>
    %2 = vector.shape_cast %1 : vector<8xf32> to vector<8x1xf32>
    %cst_1 = arith.constant 3.906250e-03 : f32
    %3 = vector.broadcast %cst_1 : f32 to vector<8x1xf32>
    %4 = arith.mulf %2, %3 : vector<8x1xf32>
    %5 = vector.broadcast %4 : vector<8x1xf32> to vector<8x256xf32>
    %6 = arith.subf %0, %5 : vector<8x256xf32>
    %7 = arith.mulf %6, %6 : vector<8x256xf32>
    %cst_2 = arith.constant dense<0.000000e+00> : vector<8xf32>
    %8 = vector.multi_reduction <add>, %7, %cst_2 [1] : vector<8x256xf32> to vector<8xf32>
    %9 = vector.shape_cast %8 : vector<8xf32> to vector<8x1xf32>
    %10 = tpu.concatenate %2, %9 in 1 : vector<8x1xf32>, vector<8x1xf32> -> vector<8x2xf32>
    %c0_3 = arith.constant 0 : index
    %c0_4 = arith.constant 0 : index
    %11 = vector.load %arg2[%c0_3, %c0_4] : memref<8x2xf32, #tpu.memory_space<vmem>>, vector<8x2xf32>
    tpu.vector_store %arg2[%c0_3, %c0_4], %10 {strides = array<i32>} : memref<8x2xf32, #tpu.memory_space<vmem>>, vector<8x2xf32>,
    return
  }
  func.func @transform_0(%arg0: i32) -> (i32, i32) {
    %c0_i32 = arith.constant 0 : i32
    %c0_i32_0 = arith.constant 0 : i32
    return %arg0, %c0_i32 : i32, i32
  }
  func.func @transform_1(%arg0: i32) -> (i32, i32) {
    %c0_i32 = arith.constant 0 : i32
    %c0_i32_0 = arith.constant 0 : i32
    return %arg0, %c0_i32 : i32, i32
  }
}

module attributes {stable_mosaic.version = 11 : i64} {
  func.func @_main_kernel(%arg0: i32, %arg1: memref<16x8x8xf32, #tpu.memory_space<vmem>>, %arg2: memref<1x1x8xf32, #tpu.memory_space<vmem>>, %arg3: memref<1x1x8xf32, #tpu.memory_space<vmem>>, %arg4: memref<8x128xbf16, #tpu.memory_space<vmem>>, %arg5: memref<64x128xf32, #tpu.memory_space<vmem>>) attributes {dimension_semantics = [#tpu.dimension_semantics<parallel>], iteration_bounds = array<i64: 2>, scalar_prefetch = 0 : i64, scratch_operands = 0 : i64, tpu.core_type = #tpu.core_type<tc>, window_params = [{transform_indices = @transform_0, window_bounds = array<i64: 16, 8, 8>}, {pipeline_mode = #tpu.pipeline_mode<synchronous>, transform_indices = @transform_1, window_bounds = array<i64: 1, 1, 8>}, {pipeline_mode = #tpu.pipeline_mode<synchronous>, transform_indices = @transform_2, window_bounds = array<i64: 1, 1, 8>}, {pipeline_mode = #tpu.pipeline_mode<synchronous>, transform_indices = @transform_3, window_bounds = array<i64: 8, 128>}, {transform_indices = @transform_4, window_bounds = array<i64: 64, 128>}]} {
    %c0 = arith.constant 0 : index
    %c0_0 = arith.constant 0 : index
    %c0_1 = arith.constant 0 : index
    %0 = vector.load %arg1[%c0, %c0_0, %c0_1] : memref<16x8x8xf32, #tpu.memory_space<vmem>>, vector<16x8x8xf32>
    %c0_2 = arith.constant 0 : index
    %c0_3 = arith.constant 0 : index
    %c0_4 = arith.constant 0 : index
    %1 = vector.load %arg2[%c0_2, %c0_3, %c0_4] : memref<1x1x8xf32, #tpu.memory_space<vmem>>, vector<1x1x8xf32>
    %2 = vector.broadcast %1 : vector<1x1x8xf32> to vector<16x8x8xf32>
    %3 = arith.mulf %0, %2 : vector<16x8x8xf32>
    %c0_5 = arith.constant 0 : index
    %c0_6 = arith.constant 0 : index
    %c0_7 = arith.constant 0 : index
    %4 = vector.load %arg3[%c0_5, %c0_6, %c0_7] : memref<1x1x8xf32, #tpu.memory_space<vmem>>, vector<1x1x8xf32>
    %5 = vector.broadcast %4 : vector<1x1x8xf32> to vector<16x8x8xf32>
    %6 = arith.addf %3, %5 : vector<16x8x8xf32>
    %cst = arith.constant 0.000000e+00 : f32
    %7 = vector.broadcast %cst : f32 to vector<16x8x8xf32>
    %8 = arith.maximumf %6, %7 : vector<16x8x8xf32>
    %9 = vector.shape_cast %8 : vector<16x8x8xf32> to vector<8x2x8x8xf32>
    %10 = vector.extract_strided_slice %9 {offsets = [0, 0, 0, 0], sizes = [8, 1, 8, 8], strides = [1, 1, 1, 1]} : vector<8x2x8x8xf32> to vector<8x1x8x8xf32>
    %11 = vector.shape_cast %10 : vector<8x1x8x8xf32> to vector<8x8x8xf32>
    %12 = vector.extract_strided_slice %9 {offsets = [0, 1, 0, 0], sizes = [8, 1, 8, 8], strides = [1, 1, 1, 1]} : vector<8x2x8x8xf32> to vector<8x1x8x8xf32>
    %13 = vector.shape_cast %12 : vector<8x1x8x8xf32> to vector<8x8x8xf32>
    %14 = arith.addf %11, %13 : vector<8x8x8xf32>
    %15 = vector.shape_cast %14 : vector<8x8x8xf32> to vector<64x8xf32>
    %16 = arith.truncf %15 : vector<64x8xf32> to vector<64x8xbf16>
    %c0_8 = arith.constant 0 : index
    %c0_9 = arith.constant 0 : index
    %17 = vector.load %arg4[%c0_8, %c0_9] : memref<8x128xbf16, #tpu.memory_space<vmem>>, vector<8x128xbf16>
    %cst_10 = arith.constant dense<0.000000e+00> : vector<64x128xf32>
    %18 = tpu.matmul %16, %17, %cst_10 {dimension_numbers = #tpu.dot_dimension_numbers<[1], [0], [0], [1], [0, 0, 1, 1], [], []>} : vector<64x8xbf16>, vector<8x128xbf16>, vector<64x128xf32> -> vector<64x128xf32>
    %c0_11 = arith.constant 0 : index
    %c0_12 = arith.constant 0 : index
    %19 = vector.load %arg5[%c0_11, %c0_12] : memref<64x128xf32, #tpu.memory_space<vmem>>, vector<64x128xf32>
    tpu.vector_store %arg5[%c0_11, %c0_12], %18 {strides = array<i32>} : memref<64x128xf32, #tpu.memory_space<vmem>>, vector<64x128xf32>,
    return
  }
  func.func @transform_0(%arg0: i32) -> (i32, i32, i32) {
    %c0_i32 = arith.constant 0 : i32
    %c0_i32_0 = arith.constant 0 : i32
    %c0_i32_1 = arith.constant 0 : i32
    return %arg0, %c0_i32, %c0_i32_0 : i32, i32, i32
  }
  func.func @transform_1(%arg0: i32) -> (i32, i32, i32) {
    %c0_i32 = arith.constant 0 : i32
    %c0_i32_0 = arith.constant 0 : i32
    %c0_i32_1 = arith.constant 0 : i32
    %c0_i32_2 = arith.constant 0 : i32
    return %c0_i32, %c0_i32_0, %c0_i32_1 : i32, i32, i32
  }
  func.func @transform_2(%arg0: i32) -> (i32, i32, i32) {
    %c0_i32 = arith.constant 0 : i32
    %c0_i32_0 = arith.constant 0 : i32
    %c0_i32_1 = arith.constant 0 : i32
    %c0_i32_2 = arith.constant 0 : i32
    return %c0_i32, %c0_i32_0, %c0_i32_1 : i32, i32, i32
  }
  func.func @transform_3(%arg0: i32) -> (i32, i32) {
    %c0_i32 = arith.constant 0 : i32
    %c0_i32_0 = arith.constant 0 : i32
    %c0_i32_1 = arith.constant 0 : i32
    return %c0_i32, %c0_i32_0 : i32, i32
  }
  func.func @transform_4(%arg0: i32) -> (i32, i32) {
    %c0_i32 = arith.constant 0 : i32
    %c0_i32_0 = arith.constant 0 : i32
    return %arg0, %c0_i32 : i32, i32
  }
}

</mosaic_0001>

<llo_original>
// kernel: squeeze.2
$region0: #{squeeze.2}
  %s0 = inlined_call_operand.vmem [shape: f32[8], index: 0, kind: input, shape index: {}]
  %s1 = inlined_call_operand.vmem [shape: f32[2,4], index: 1, kind: output, shape index: {}]
  $region1: #{squeeze.2} parent=0
    #allocation0 [shape = 'u8[4096]{0}', space=vmem, size = 0x1000, scoped, tag = 'scoped mem for output reshape']
    #allocation1 [shape = 'u8[4096]{0}', space=vmem, size = 0x1000, scoped, tag = 'scoped mem for input reshape']
    %s3 = sshllo.u32 0, 1
    %v4 = vld [vmem:[%s0] sm:%s3]
    %5 = vst [vmem:[#allocation1] sm:%s3] %v4
    %v6 = vld [vmem:[#allocation1] sm:$0x1]
    %vm7 = vcmask 31744
    %8 = vst.msk [vmem:[#allocation0] sm:$0x1] %vm7, %v6
    %v9 = vld [vmem:[#allocation1] sm:$0x1]
    %10 = vrot.lane.b32.xlu0 %v9, 124
    %v11 = vpop.permute.xlu0 %10
    %vm12 = vcmask 31744
    %s13 = scalar_lea.vmem [#allocation0], 1
    %14 = vst.msk [vmem:[%s13] sm:$0x1] %vm12, %v11
    %s16 = sshllo.u32 0, 2
    %v18 = vld [vmem:[#allocation0] sm:%s16]
    %s19 = sshllo.u32 0, 2
    %20 = vst [vmem:[%s1] sm:%s19] %v18

// kernel: tile.18
$region0: #{tile.18}
  #allocation0 [shape = 's32[1]{0}', space=sflag, size = 0x4, scoped, tag = 'scoped memory for tile.18']
  %s0 = inlined_call_operand.vmem [shape: f32[4], index: 0, kind: input, shape index: {}]
  %s1 = inlined_call_operand.vmem [shape: f32[2,4], index: 1, kind: output, shape index: {}]
  // Predicated region
  $region2: #{tile.18} parent=0 // pred_check
    _
  $region3: #{tile.18} parent=0 // pred_check_branch
    %3 = sbr.rel (0) target = $region5
  $region4: #{tile.18} parent=0 // pred_region
    _
  $region5: #{tile.18} parent=0 // pred_fallthru
    _
  %v4 = vld [vmem:[%s0] ss:$0 sm:$0xff]
  %5 = vst [vmem:[%s1] sm:$0x3] %v4

// kernel: tile.19
$region0: #{tile.19}
  %s0 = inlined_call_operand.vmem [shape: f32[2,4], index: 0, kind: input, shape index: {}]
  %s1 = inlined_call_operand.vmem [shape: f32[1,1,8], index: 1, kind: output, shape index: {}]
  $region1: #{tile.19} parent=0
    #allocation0 [shape = 'u8[4096]{0}', space=vmem, size = 0x1000, scoped, tag = 'scoped mem for output reshape']
    #allocation1 [shape = 'u8[4096]{0}', space=vmem, size = 0x1000, scoped, tag = 'scoped mem for input reshape']
    %s3 = sshllo.u32 0, 2
    %v4 = vld [vmem:[%s0] sm:%s3]
    %5 = vst [vmem:[#allocation1] sm:%s3] %v4
    %v6 = vld [vmem:[#allocation1] sm:$0x1]
    %vm7 = vcmask 31744
    %8 = vst.msk [vmem:[#allocation0] sm:$0x1] %vm7, %v6
    %s9 = scalar_lea.vmem [#allocation1], 1
    %v10 = vld [vmem:[%s9] sm:$0x1]
    %11 = vrot.lane.b32.xlu0 %v10, 4
    %v12 = vpop.permute.xlu0 %11
    %vm13 = vcmask 64544
    %14 = vst.msk [vmem:[#allocation0] sm:$0x1] %vm13, %v12
    %s16 = sshllo.u32 0, 1
    %v18 = vld [vmem:[#allocation0] sm:%s16]
    %s19 = sshllo.u32 0, 1
    %20 = vst [vmem:[%s1] sm:%s19] %v18

// kernel: transition_layer.2
$region0: #{transition_layer.2}
  #allocation0 [shape = 'u32[]', space=smem, size = 0x4, offset = 0x4, fixed_abs, tag = 'smem constant byte address 0x4 - core index']
  #allocation1 [shape = 'u32[144,128]{1,0:T(1,128)}', space=vmem, size = 0x12000, scoped, tag = 'internal scratch']
  %s0 = inlined_call_operand.vmem [shape: f32[8,256], index: 0, kind: input, shape index: {}]
  %s1 = inlined_call_operand.vmem [shape: f32[8,2], index: 1, kind: output, shape index: {}]
  %s2 = sld [smem:[#allocation0]]
  $region14: #{transition_layer.2} parent=0
    _
  %s4 = ssub.s32 1, %s2
  %s5 = scalar_select 0, %s4, %s2
  // Predicated region
  $region2: #{transition_layer.2} parent=0 // pred_check
    _
  $region3: #{transition_layer.2} parent=0 // pred_check_branch
    %7 = sbr.rel (0) target = $region5
  $region4: #{transition_layer.2} parent=0 // pred_region
    _
  $region5: #{transition_layer.2} parent=0 // pred_fallthru
    _
  %v8 = vld [vmem:[%s0] sm:$0xff]
  %v9 = vld [vmem:[%s0 + $0x8] sm:$0xff]
  %v10 = vadd.f32 %v8, %v9
  %11 = vadd.xlane.f32.xlu0 %v10
  %v12 = vpop.xlane.xlu0 %11
  %v13 = vmul.f32 %v12, 0.00390625
  %v14 = vsub.f32 %v8, %v13
  %v15 = vsub.f32 %v9, %v13
  %v16 = vmul.f32 %v14, %v14
  %v17 = vmul.f32 %v15, %v15
  %v18 = vadd.f32 %v16, %v17
  %19 = vadd.xlane.f32.xlu0 %v18
  %v20 = vpop.xlane.xlu0 %19
  %vm21 = vcmask 7168
  %v22 = vsel %vm21, %v12, %v20
  %vm23 = vcmask 15360
  %24 = vst.msk [vmem:[%s1] sm:$0xff] %vm23, %v22
  // Predicated region
  $region6: #{transition_layer.2} parent=0 // pred_check
    _
  $region7: #{transition_layer.2} parent=0 // pred_check_branch
    %26 = sbr.rel (0) target = $region9
  $region8: #{transition_layer.2} parent=0 // pred_region
    _
  $region9: #{transition_layer.2} parent=0 // pred_fallthru
    _
  // Predicated region
  $region10: #{transition_layer.2} parent=0 // pred_check
    _
  $region11: #{transition_layer.2} parent=0 // pred_check_branch
    %28 = sbr.rel (0) target = $region13
  $region12: #{transition_layer.2} parent=0 // pred_region
    _
  $region13: #{transition_layer.2} parent=0 // pred_fallthru
    _

// kernel: transition_layer.3
$region0: #{transition_layer.3}
  #allocation0 [shape = 'u32[]', space=smem, size = 0x4, offset = 0x4, fixed_abs, tag = 'smem constant byte address 0x4 - core index']
  #allocation1 [shape = 'u32[144,128]{1,0:T(1,128)}', space=vmem, size = 0x12000, scoped, tag = 'internal scratch']
  %s0 = inlined_call_operand.vmem [shape: f32[32,8,8], index: 0, kind: input, shape index: {}]
  %s1 = inlined_call_operand.vmem [shape: f32[1,1,8], index: 1, kind: input, shape index: {}]
  %s2 = inlined_call_operand.vmem [shape: f32[1,1,8], index: 2, kind: input, shape index: {}]
  %s3 = inlined_call_operand.vmem [shape: bf16[8,128], index: 3, kind: input, shape index: {}]
  %s4 = inlined_call_operand.vmem [shape: f32[128,128], index: 4, kind: output, shape index: {}]
  %s5 = sld [smem:[#allocation0]]
  $region49: #{transition_layer.3} parent=0
    _
  %s7 = ssub.s32 1, %s5
  %s8 = scalar_select 0, %s7, %s5
  loop: start=0, step=1, limit=4
  $region2: #{transition_layer.3} parent=0 // loop_pre_header
    _
  $region3: #{transition_layer.3} parent=0 // loop_header
    %s10 = sphi 0, %s14
    %p11 = scmp.ge.s32.totalorder %s10, 4
    %s20 = sphi 0, %s22
    %s23 = sphi 0, %s20
    %s24 = sphi 0, %s23
    %s40 = sphi 0, %s24
    %s44 = sphi 0, %s44
    %s46 = sphi 0, %s44
    %s47 = sphi 0, %s46
    %s61 = sphi 0, %s47
    %s65 = sphi 0, %s65
    %s67 = sphi 0, %s65
    %s68 = sphi 0, %s67
    %s82 = sphi 0, %s68
    %s86 = sphi 0, %s86
    %s88 = sphi 0, %s86
    %s89 = sphi 0, %s88
    %s103 = sphi 0, %s89
    %s109 = sphi 0, %s111
    %s112 = sphi 0, %s109
    %s113 = sphi 0, %s112
    %s129 = sphi 0, %s113
  $region4: #{transition_layer.3} parent=0 // loop_header_branch
    %13 = sbr.rel (%p11) target = $region8
  $region5: #{transition_layer.3} parent=0 // loop_body
    %s15 = ssub.s32 %s10, 1
    %s16 = ssub.s32 %s10, 2
    %s17 = sadd.s32 %s10, 1
    %s18 = ssub.s32 %s10, %s17
    %p19 = scmp.eq.s32.totalorder %s18, 0
    %s21 = sadd.s32 %s20, 1
    %s22 = scalar_select %p19, %s20, %s21
    %p25 = pneg %p19
    %p26 = scmp.eq.s32.totalorder %s10, 1
    %p27 = por %p25, %p26
    %p28 = scmp.ne.s32.totalorder %s20, %s23
    %p29 = scmp.eq.s32.totalorder %s10, 0
    %p30 = por %p28, %p29
    %p31 = scmp.ne.s32.totalorder %s20, %s23
    %p32 = scmp.eq.s32.totalorder %s15, 1
    %p33 = por %p31, %p32
    %p34 = scmp.ne.s32.totalorder %s23, %s24
    %p35 = scmp.eq.s32.totalorder %s15, 0
    %p36 = por %p34, %p35
    %p37 = scmp.ne.s32.totalorder %s23, %s24
    %p38 = scmp.eq.s32.totalorder %s16, 1
    %p39 = por %p37, %p38
    %p41 = scmp.ne.s32.totalorder %s24, %s40
    %p42 = scmp.eq.s32.totalorder %s16, 0
    %p43 = por %p41, %p42
    %s45 = sadd.s32 %s44, 1
    %p48 = scmp.eq.s32.totalorder %s10, 1
    %p49 = scmp.ne.s32.totalorder %s44, %s46
    %p50 = scmp.eq.s32.totalorder %s10, 0
    %p51 = por %p49, %p50
    %p52 = scmp.ne.s32.totalorder %s44, %s46
    %p53 = scmp.eq.s32.totalorder %s15, 1
    %p54 = por %p52, %p53
    %p55 = scmp.ne.s32.totalorder %s46, %s47
    %p56 = scmp.eq.s32.totalorder %s15, 0
    %p57 = por %p55, %p56
    %p58 = scmp.ne.s32.totalorder %s46, %s47
    %p59 = scmp.eq.s32.totalorder %s16, 1
    %p60 = por %p58, %p59
    %p62 = scmp.ne.s32.totalorder %s47, %s61
    %p63 = scmp.eq.s32.totalorder %s16, 0
    %p64 = por %p62, %p63
    %s66 = sadd.s32 %s65, 1
    %p69 = scmp.eq.s32.totalorder %s10, 1
    %p70 = scmp.ne.s32.totalorder %s65, %s67
    %p71 = scmp.eq.s32.totalorder %s10, 0
    %p72 = por %p70, %p71
    %p73 = scmp.ne.s32.totalorder %s65, %s67
    %p74 = scmp.eq.s32.totalorder %s15, 1
    %p75 = por %p73, %p74
    %p76 = scmp.ne.s32.totalorder %s67, %s68
    %p77 = scmp.eq.s32.totalorder %s15, 0
    %p78 = por %p76, %p77
    %p79 = scmp.ne.s32.totalorder %s67, %s68
    %p80 = scmp.eq.s32.totalorder %s16, 1
    %p81 = por %p79, %p80
    %p83 = scmp.ne.s32.totalorder %s68, %s82
    %p84 = scmp.eq.s32.totalorder %s16, 0
    %p85 = por %p83, %p84
    %s87 = sadd.s32 %s86, 1
    %p90 = scmp.eq.s32.totalorder %s10, 1
    %p91 = scmp.ne.s32.totalorder %s86, %s88
    %p92 = scmp.eq.s32.totalorder %s10, 0
    %p93 = por %p91, %p92
    %p94 = scmp.ne.s32.totalorder %s86, %s88
    %p95 = scmp.eq.s32.totalorder %s15, 1
    %p96 = por %p94, %p95
    %p97 = scmp.ne.s32.totalorder %s88, %s89
    %p98 = scmp.eq.s32.totalorder %s15, 0
    %p99 = por %p97, %p98
    %p100 = scmp.ne.s32.totalorder %s88, %s89
    %p101 = scmp.eq.s32.totalorder %s16, 1
    %p102 = por %p100, %p101
    %p104 = scmp.ne.s32.totalorder %s89, %s103
    %p105 = scmp.eq.s32.totalorder %s16, 0
    %p106 = por %p104, %p105
    %s107 = ssub.s32 %s10, %s17
    %p108 = scmp.eq.s32.totalorder %s107, 0
    %s110 = sadd.s32 %s109, 1
    %s111 = scalar_select %p108, %s109, %s110
    %p114 = pneg %p108
    %p115 = scmp.eq.s32.totalorder %s10, 1
    %p116 = por %p114, %p115
    %p117 = scmp.ne.s32.totalorder %s109, %s112
    %p118 = scmp.eq.s32.totalorder %s10, 0
    %p119 = por %p117, %p118
    %p120 = scmp.ne.s32.totalorder %s109, %s112
    %p121 = scmp.eq.s32.totalorder %s15, 1
    %p122 = por %p120, %p121
    %p123 = scmp.ne.s32.totalorder %s112, %s113
    %p124 = scmp.eq.s32.totalorder %s15, 0
    %p125 = por %p123, %p124
    %p126 = scmp.ne.s32.totalorder %s112, %s113
    %p127 = scmp.eq.s32.totalorder %s16, 1
    %p128 = por %p126, %p127
    %p130 = scmp.ne.s32.totalorder %s113, %s129
    %p131 = scmp.eq.s32.totalorder %s16, 0
    %p132 = por %p130, %p131
    %p133 = scmp.le.s32.totalorder 1, %s10
    %p134 = scmp.lt.s32.totalorder %s10, 3
    %p135 = pnand %p133, %p134
    %p136 = pneg %p135
    // Predicated region
    $region9: #{transition_layer.3} parent=5 // pred_check
      _
    $region10: #{transition_layer.3} parent=5 // pred_check_branch
      %138 = sbr.rel (%p135) target = $region12
    $region11: #{transition_layer.3} parent=5 // pred_region
      %s139 = ssub.s32 %s10, 1
      // Predicated region
      $region13: #{transition_layer.3} parent=11 // pred_check
        %p140 = pneg %p57
      $region14: #{transition_layer.3} parent=11 // pred_check_branch
        %142 = sbr.rel (%p140) target = $region16
      $region15: #{transition_layer.3} parent=11 // pred_region
        _
      $region16: #{transition_layer.3} parent=11 // pred_fallthru
        _
      // Predicated region
      $region17: #{transition_layer.3} parent=11 // pred_check
        %p143 = pneg %p78
      $region18: #{transition_layer.3} parent=11 // pred_check_branch
        %145 = sbr.rel (%p143) target = $region20
      $region19: #{transition_layer.3} parent=11 // pred_region
        _
      $region20: #{transition_layer.3} parent=11 // pred_fallthru
        _
      // Predicated region
      $region21: #{transition_layer.3} parent=11 // pred_check
        %p146 = pneg %p99
      $region22: #{transition_layer.3} parent=11 // pred_check_branch
        %148 = sbr.rel (%p146) target = $region24
      $region23: #{transition_layer.3} parent=11 // pred_region
        _
      $region24: #{transition_layer.3} parent=11 // pred_fallthru
        _
    $region12: #{transition_layer.3} parent=5 // pred_fallthru
      _
    %p149 = scmp.lt.s32.totalorder %s10, 2
    // Predicated region
    $region25: #{transition_layer.3} parent=5 // pred_check
      %p150 = pneg %p149
    $region26: #{transition_layer.3} parent=5 // pred_check_branch
      %152 = sbr.rel (%p150) target = $region28
    $region27: #{transition_layer.3} parent=5 // pred_region
      // Predicated region
      $region29: #{transition_layer.3} parent=27 // pred_check
        %p153 = pneg %p30
      $region30: #{transition_layer.3} parent=27 // pred_check_branch
        %155 = sbr.rel (%p153) target = $region32
      $region31: #{transition_layer.3} parent=27 // pred_region
        %s156 = smul.u32 16, %s10
        %p157 = scmp.lt.s32.totalorder %s156, 31
        %s158 = scalar_select %p157, %s156, 31
        %s159 = smul.addr %s158, 8
        %s160 = scalar_lea.vmem %s0, %s159
        %s161 = smul.u32 16, %s10
      $region32: #{transition_layer.3} parent=27 // pred_fallthru
        _
    $region28: #{transition_layer.3} parent=5 // pred_fallthru
      _
    %p162 = scmp.le.s32.totalorder 1, %s10
    %p163 = scmp.lt.s32.totalorder %s10, 3
    %p164 = pnand %p162, %p163
    %p165 = pneg %p164
    // Predicated region
    $region33: #{transition_layer.3} parent=5 // pred_check
      _
    $region34: #{transition_layer.3} parent=5 // pred_check_branch
      %167 = sbr.rel (%p164) target = $region36
    $region35: #{transition_layer.3} parent=5 // pred_region
      %s168 = ssub.s32 %s10, 1
      %s169 = smul.u32 16, %s15
      %p170 = scmp.lt.s32.totalorder %s169, 31
      %s171 = scalar_select %p170, %s169, 31
      %s172 = smul.addr %s171, 8
      %s173 = scalar_lea.vmem %s0, %s172
      %p174 = pneg %p36
      %p175 = pneg %p33
      %p176 = pneg %p57
      %p177 = pneg %p54
      %p178 = pneg %p78
      %p179 = pneg %p75
      %p180 = pneg %p99
      %p181 = pneg %p96
      %p182 = pneg %p125
      %p183 = pneg %p122
      %s184 = smul.u32 8, %s15
      %p185 = scmp.lt.s32.totalorder %s184, 15
      %s186 = scalar_select %p185, %s184, 15
      %s187 = smul.addr %s186, 8
      %s188 = scalar_lea.vmem %s4, %s187
      %s189 = smul.u32 16, %s15
      %p190 = scmp.lt.s32.totalorder %s189, 31
      %s191 = scalar_select %p190, %s189, 31
      %s192 = smul.addr %s191, 8
      %s193 = scalar_lea.vmem %s0, %s192
      %s194 = smul.u32 16, %s15
      %s195 = smul.u32 8, %s15
      %p196 = scmp.lt.s32.totalorder %s195, 15
      %s197 = scalar_select %p196, %s195, 15
      %s198 = smul.addr %s197, 8
      %s199 = scalar_lea.vmem %s4, %s198
      %s200 = smul.u32 8, %s15
      %v202 = vld [vmem:[%s193] sm:$0xff]
      %v203 = vld [vmem:[%s193 + $0x8] sm:$0xff]
      %v204 = vld [vmem:[%s193 + $0x10] sm:$0xff]
      %v205 = vld [vmem:[%s193 + $0x18] sm:$0xff]
      %v206 = vld [vmem:[%s193 + $0x20] sm:$0xff]
      %v207 = vld [vmem:[%s193 + $0x28] sm:$0xff]
      %v208 = vld [vmem:[%s193 + $0x30] sm:$0xff]
      %v209 = vld [vmem:[%s193 + $0x38] sm:$0xff]
      %v210 = vld [vmem:[%s193 + $0x40] sm:$0xff]
      %v211 = vld [vmem:[%s193 + $0x48] sm:$0xff]
      %v212 = vld [vmem:[%s193 + $0x50] sm:$0xff]
      %v213 = vld [vmem:[%s193 + $0x58] sm:$0xff]
      %v214 = vld [vmem:[%s193 + $0x60] sm:$0xff]
      %v215 = vld [vmem:[%s193 + $0x68] sm:$0xff]
      %v216 = vld [vmem:[%s193 + $0x70] sm:$0xff]
      %v217 = vld [vmem:[%s193 + $0x78] sm:$0xff]
      %v218 = vld [vmem:[%s1] sm:$0x1]
      %v220 = vlaneseq
      %v221 = vshrl.u32 %v220, 7
      %v222 = vsub.s32 0, %v221
      %v223 = vrot.slane %v218, %v222
      %v225 = vmul.f32 %v202, %v223
      %v226 = vmul.f32 %v203, %v223
      %v227 = vmul.f32 %v204, %v223
      %v228 = vmul.f32 %v205, %v223
      %v229 = vmul.f32 %v206, %v223
      %v230 = vmul.f32 %v207, %v223
      %v231 = vmul.f32 %v208, %v223
      %v232 = vmul.f32 %v209, %v223
      %v233 = vmul.f32 %v210, %v223
      %v234 = vmul.f32 %v211, %v223
      %v235 = vmul.f32 %v212, %v223
      %v236 = vmul.f32 %v213, %v223
      %v237 = vmul.f32 %v214, %v223
      %v238 = vmul.f32 %v215, %v223
      %v239 = vmul.f32 %v216, %v223
      %v240 = vmul.f32 %v217, %v223
      %v241 = vld [vmem:[%s2] sm:$0x1]
      %v243 = vlaneseq
      %v244 = vshrl.u32 %v243, 7
      %v245 = vsub.s32 0, %v244
      %v246 = vrot.slane %v241, %v245
      %v248 = vadd.f32 %v225, %v246
      %v249 = vadd.f32 %v226, %v246
      %v250 = vadd.f32 %v227, %v246
      %v251 = vadd.f32 %v228, %v246
      %v252 = vadd.f32 %v229, %v246
      %v253 = vadd.f32 %v230, %v246
      %v254 = vadd.f32 %v231, %v246
      %v255 = vadd.f32 %v232, %v246
      %v256 = vadd.f32 %v233, %v246
      %v257 = vadd.f32 %v234, %v246
      %v258 = vadd.f32 %v235, %v246
      %v259 = vadd.f32 %v236, %v246
      %v260 = vadd.f32 %v237, %v246
      %v261 = vadd.f32 %v238, %v246
      %v262 = vadd.f32 %v239, %v246
      %v263 = vadd.f32 %v240, %v246
      %v264 = vmax.f32 %v248, 0.0
      %v265 = vmax.f32 %v249, 0.0
      %v266 = vmax.f32 %v250, 0.0
      %v267 = vmax.f32 %v251, 0.0
      %v268 = vmax.f32 %v252, 0.0
      %v269 = vmax.f32 %v253, 0.0
      %v270 = vmax.f32 %v254, 0.0
      %v271 = vmax.f32 %v255, 0.0
      %v272 = vmax.f32 %v256, 0.0
      %v273 = vmax.f32 %v257, 0.0
      %v274 = vmax.f32 %v258, 0.0
      %v275 = vmax.f32 %v259, 0.0
      %v276 = vmax.f32 %v260, 0.0
      %v277 = vmax.f32 %v261, 0.0
      %v278 = vmax.f32 %v262, 0.0
      %v279 = vmax.f32 %v263, 0.0
      %v280 = vadd.f32 %v264, %v265
      %v281 = vadd.f32 %v266, %v267
      %v282 = vadd.f32 %v268, %v269
      %v283 = vadd.f32 %v270, %v271
      %v284 = vadd.f32 %v272, %v273
      %v285 = vadd.f32 %v274, %v275
      %v286 = vadd.f32 %v276, %v277
      %v287 = vadd.f32 %v278, %v279
      %v288 = vpack.c.bf16 %v281, %v280
      %v289 = vpack.c.bf16 %v283, %v282
      %v290 = vpack.c.bf16 %v285, %v284
      %v291 = vpack.c.bf16 %v287, %v286
      %v292 = vld [vmem:[%s3] sm:$0xf]
      %vm293 = vcmask 64512
      %v295 = vsel %vm293, %v288, 0
      %v298 = vsel %vm293, %v289, 0
      %v301 = vsel %vm293, %v290, 0
      %v304 = vsel %vm293, %v291, 0
      %vm306 = vcmask 1043456
      %v308 = vsel %vm306, %v292, 0
      %310 = vmatprep.subr.bf16.mxu0 0
      %311 = vmatpush1.bf16.msra.mxu0 %v308
      %312 = vmatprep.subr.bf16.mxu0 0
      %313 = vmatpush1.bf16.msra.mxu0 0
      %314 = vmatprep.subr.bf16.mxu0 0
      %315 = vmatpush1.bf16.msra.mxu0 0
      %316 = vmatprep.subr.bf16.mxu0 0
      %317 = vmatpush1.bf16.msra.mxu0 0
      %318 = vmatprep.subr.bf16.mxu0 0
      %319 = vmatpush1.bf16.msra.mxu0 0
      %320 = vmatprep.subr.bf16.mxu0 0
      %321 = vmatpush1.bf16.msra.mxu0 0
      %322 = vmatprep.subr.bf16.mxu0 0
      %323 = vmatpush1.bf16.msra.mxu0 0
      %324 = vmatprep.subr.bf16.mxu0 0
      %325 = vmatpush1.bf16.msra.mxu0 0
      %326 = vmatprep.subr.bf16.mxu0 0
      %327 = vmatpush1.bf16.msra.mxu0 0
      %328 = vmatprep.subr.bf16.mxu0 0
      %329 = vmatpush1.bf16.msra.mxu0 0
      %330 = vmatprep.subr.bf16.mxu0 0
      %331 = vmatpush1.bf16.msra.mxu0 0
      %332 = vmatprep.subr.bf16.mxu0 0
      %333 = vmatpush1.bf16.msra.mxu0 0
      %334 = vmatprep.subr.bf16.mxu0 0
      %335 = vmatpush1.bf16.msra.mxu0 0
      %336 = vmatprep.subr.bf16.mxu0 0
      %337 = vmatpush1.bf16.msra.mxu0 0
      %338 = vmatprep.subr.bf16.mxu0 0
      %339 = vmatpush1.bf16.msra.mxu0 0
      %340 = vmatprep.subr.bf16.mxu0 0
      %341 = vmatpush1.bf16.msra.mxu0 0
      %342 = vmatprep.mubr.bf16.mxu0 0
      %343 = vmatmul.mubr.bf16.gmra.mrb[0].mxu0 %v295
      %v344 = vpop.f32.mrb[0].mxu0
      %v345 = vadd.f32 0.0, %v344
      %v346 = vpop.f32.mrb[0].mxu0
      %v347 = vpop.f32.mrb[0].mxu0
      %v348 = vadd.f32 0.0, %v347
      %v349 = vpop.f32.mrb[0].mxu0
      %350 = vmatprep.mubr.bf16.mxu0 0
      %351 = vmatmul.mubr.bf16.gmra.mrb[0].mxu0 %v298
      %v352 = vpop.f32.mrb[0].mxu0
      %v353 = vadd.f32 0.0, %v352
      %v354 = vpop.f32.mrb[0].mxu0
      %v355 = vpop.f32.mrb[0].mxu0
      %v356 = vadd.f32 0.0, %v355
      %v357 = vpop.f32.mrb[0].mxu0
      %358 = vmatprep.mubr.bf16.mxu0 0
      %359 = vmatmul.mubr.bf16.gmra.mrb[0].mxu0 %v301
      %v360 = vpop.f32.mrb[0].mxu0
      %v361 = vadd.f32 0.0, %v360
      %v362 = vpop.f32.mrb[0].mxu0
      %v363 = vpop.f32.mrb[0].mxu0
      %v364 = vadd.f32 0.0, %v363
      %v365 = vpop.f32.mrb[0].mxu0
      %366 = vmatprep.mubr.bf16.mxu0 0
      %367 = vmatmul.mubr.bf16.gmra.mrb[0].mxu0 %v304
      %v368 = vpop.f32.mrb[0].mxu0
      %v369 = vadd.f32 0.0, %v368
      %v370 = vpop.f32.mrb[0].mxu0
      %v371 = vpop.f32.mrb[0].mxu0
      %v372 = vadd.f32 0.0, %v371
      %v373 = vpop.f32.mrb[0].mxu0
      %374 = vdwg.mxu0
      %375 = vst [vmem:[%s199] sm:$0xff] %v345
      %376 = vst [vmem:[%s199 + $0x8] sm:$0xff] %v348
      %377 = vst [vmem:[%s199 + $0x10] sm:$0xff] %v353
      %378 = vst [vmem:[%s199 + $0x18] sm:$0xff] %v356
      %379 = vst [vmem:[%s199 + $0x20] sm:$0xff] %v361
      %380 = vst [vmem:[%s199 + $0x28] sm:$0xff] %v364
      %381 = vst [vmem:[%s199 + $0x30] sm:$0xff] %v369
      %382 = vst [vmem:[%s199 + $0x38] sm:$0xff] %v372
      %s383 = smul.u32 8, %s15
      %p384 = scmp.lt.s32.totalorder %s383, 15
      %s385 = scalar_select %p384, %s383, 15
      %s386 = smul.addr %s385, 8
      %s387 = scalar_lea.vmem %s4, %s386
      // Predicated region
      $region37: #{transition_layer.3} parent=35 // pred_check
        %p388 = pneg %p122
      $region38: #{transition_layer.3} parent=35 // pred_check_branch
        %390 = sbr.rel (%p388) target = $region40
      $region39: #{transition_layer.3} parent=35 // pred_region
        %s391 = smul.u32 8, %s15
      $region40: #{transition_layer.3} parent=35 // pred_fallthru
        _
    $region36: #{transition_layer.3} parent=5 // pred_fallthru
      _
    %p392 = scmp.le.s32.totalorder 2, %s10
    // Predicated region
    $region41: #{transition_layer.3} parent=5 // pred_check
      %p393 = pneg %p392
    $region42: #{transition_layer.3} parent=5 // pred_check_branch
      %395 = sbr.rel (%p393) target = $region44
    $region43: #{transition_layer.3} parent=5 // pred_region
      %s396 = ssub.s32 %s10, 2
      // Predicated region
      $region45: #{transition_layer.3} parent=43 // pred_check
        %p397 = pneg %p128
      $region46: #{transition_layer.3} parent=43 // pred_check_branch
        %399 = sbr.rel (%p397) target = $region48
      $region47: #{transition_layer.3} parent=43 // pred_region
        %s400 = smul.u32 8, %s16
        %p401 = scmp.lt.s32.totalorder %s400, 15
        %s402 = scalar_select %p401, %s400, 15
        %s403 = smul.addr %s402, 8
        %s404 = scalar_lea.vmem %s4, %s403
      $region48: #{transition_layer.3} parent=43 // pred_fallthru
        _
    $region44: #{transition_layer.3} parent=5 // pred_fallthru
      _
  $region6: #{transition_layer.3} parent=0 // loop_footer
    %s14 = sadd.s32 1, %s10
  $region7: #{transition_layer.3} parent=0 // loop_footer_branch
    %9 = sbr.rel target = $region3
  $region8: #{transition_layer.3} parent=0 // loop_exit
    _

</llo_original>
